<compile_context>
chip_gen: v5e
topology: v5e:2x2
jax: 0.10.0
libtpu: 0.0.40
codegen_flags: <defaults>
</compile_context>

<pallas_src>
import math
import functools
import numpy as np

import jax
import jax.numpy as jnp
from jax.experimental import pallas as pl
from jax.experimental.pallas import tpu as pltpu


# ----------------------------------------------------------------------------- utils
def _round_up(x, m):
    return ((x + m - 1) // m) * m


def _choose_row_tile(m):
    mp = _round_up(m, 8)
    if mp > 256:
        mp = _round_up(m, 128)
        return mp, 128
    if mp >= 32 and mp % 16 == 0:
        return mp, mp // 2
    return mp, mp


# ----------------------------------------------------------------- linear (bf16 matmul)
def _linear_kernel(x_ref, w_ref, b_ref, o_ref, *, relu):
    acc = jnp.dot(x_ref[...], w_ref[...], preferred_element_type=jnp.float32)
    acc = acc + b_ref[...]
    if relu:
        acc = jnp.maximum(acc, 0.0)
    o_ref[...] = acc


@functools.lru_cache(maxsize=None)
def _make_linear_call(mp, kp, npad, tm, relu):
    kern = functools.partial(_linear_kernel, relu=relu)
    return jax.jit(pl.pallas_call(
        kern,
        out_shape=jax.ShapeDtypeStruct((mp, npad), jnp.float32),
        grid=(mp // tm,),
        in_specs=[
            pl.BlockSpec((tm, kp), lambda i: (i, 0)),
            pl.BlockSpec((kp, npad), lambda i: (0, 0)),
            pl.BlockSpec((1, npad), lambda i: (0, 0)),
        ],
        out_specs=pl.BlockSpec((tm, npad), lambda i: (i, 0)),
        compiler_params=pltpu.CompilerParams(dimension_semantics=("parallel",)),
    ))


def pallas_linear(x, dp, relu=False):
    """x: [M, K] f32; dp: pre-padded bf16 weight dict -> act(x @ w + b) [M, n]."""
    m, k = x.shape
    kp, npad = dp["w"].shape
    mp, tm = _choose_row_tile(m)
    xb = x.astype(jnp.bfloat16)
    if mp != m or kp != k:
        xb = jnp.zeros((mp, kp), jnp.bfloat16).at[:m, :k].set(xb)
    out = _make_linear_call(mp, kp, npad, tm, relu)(xb, dp["w"], dp["b"])
    if mp != m or npad != dp["n"]:
        out = out[:m, :dp["n"]]
    return out


# --------------------------------------------------------------------------- attention
def _attn_kernel(q_ref, k_ref, v_ref, o_ref, *, scale):
    q = q_ref[...].astype(jnp.bfloat16)
    k = k_ref[...].astype(jnp.bfloat16)
    v = v_ref[...].astype(jnp.bfloat16)
    s = jax.lax.dot_general(q, k, (((2,), (2,)), ((0,), (0,))),
                            preferred_element_type=jnp.float32) * scale
    s = s - jnp.max(s, axis=-1, keepdims=True)
    p = jnp.exp(s)
    p = p * pl.reciprocal(jnp.sum(p, axis=-1, keepdims=True), approx=True)
    o_ref[...] = jax.lax.dot_general(p.astype(jnp.bfloat16), v,
                                     (((2,), (1,)), ((0,), (0,))),
                                     preferred_element_type=jnp.float32)


@functools.lru_cache(maxsize=None)
def _make_attn_call(bh, hb, sq, sk, dh):
    kern = functools.partial(_attn_kernel, scale=1.0 / math.sqrt(dh))
    return jax.jit(pl.pallas_call(
        kern,
        out_shape=jax.ShapeDtypeStruct((bh, sq, dh), jnp.float32),
        grid=(bh // hb,),
        in_specs=[
            pl.BlockSpec((hb, sq, dh), lambda i: (i, 0, 0)),
            pl.BlockSpec((hb, sk, dh), lambda i: (i, 0, 0)),
            pl.BlockSpec((hb, sk, dh), lambda i: (i, 0, 0)),
        ],
        out_specs=pl.BlockSpec((hb, sq, dh), lambda i: (i, 0, 0)),
        compiler_params=pltpu.CompilerParams(dimension_semantics=("parallel",)),
    ))


def pallas_attention(q, k, v):
    """q: [BH, Sq, dh], k/v: [BH, Sk, dh] -> softmax(qk^T/sqrt(dh)) v (f32)."""
    bh, sq, dh = q.shape
    sk = k.shape[1]
    hb = next(h for h in (8, 4, 2, 1) if bh % h == 0)
    return _make_attn_call(bh, hb, sq, sk, dh)(q, k, v)


# ------------------------------------------------------- fused residual-add + LayerNorm
def _res_ln_kernel(x_ref, r_ref, g_ref, b_ref, o_ref):
    y = x_ref[...] + r_ref[...]
    mean = jnp.mean(y, axis=-1, keepdims=True)
    c = y - mean
    var = jnp.mean(c * c, axis=-1, keepdims=True)
    o_ref[...] = c * jax.lax.rsqrt(var + 1e-5) * g_ref[...] + b_ref[...]


@functools.lru_cache(maxsize=None)
def _make_res_ln_call(mp, c, tm):
    return jax.jit(pl.pallas_call(
        _res_ln_kernel,
        out_shape=jax.ShapeDtypeStruct((mp, c), jnp.float32),
        grid=(mp // tm,),
        in_specs=[
            pl.BlockSpec((tm, c), lambda i: (i, 0)),
            pl.BlockSpec((tm, c), lambda i: (i, 0)),
            pl.BlockSpec((1, c), lambda i: (0, 0)),
            pl.BlockSpec((1, c), lambda i: (0, 0)),
        ],
        out_specs=pl.BlockSpec((tm, c), lambda i: (i, 0)),
        compiler_params=pltpu.CompilerParams(dimension_semantics=("parallel",)),
    ))


def pallas_res_layernorm(x, res, nparams):
    """LayerNorm(x + res) * g + b over rows of [M, C]."""
    m, c = x.shape
    mp, tm = _choose_row_tile(m)
    if mp != m:
        x = jnp.pad(x, ((0, mp - m), (0, 0)))
        res = jnp.pad(res, ((0, mp - m), (0, 0)))
    out = _make_res_ln_call(mp, c, tm)(x, res,
                                       nparams["g"].reshape(1, c),
                                       nparams["b"].reshape(1, c))
    return out[:m] if mp != m else out


# ------------------------------------------- fused GroupNorm + affine (+residual) + ReLU
def _gn_kernel(x_ref, g_ref, b_ref, o_ref, *, relu):
    x = x_ref[...]
    m = jnp.mean(jnp.mean(x, axis=2, keepdims=True), axis=1, keepdims=True)
    c = x - m
    v = jnp.mean(jnp.mean(c * c, axis=2, keepdims=True), axis=1, keepdims=True)
    y = c * jax.lax.rsqrt(v + 1e-5) * g_ref[...] + b_ref[...]
    if relu:
        y = jnp.maximum(y, 0.0)
    o_ref[...] = y


def _gn_res_kernel(x_ref, r_ref, g_ref, b_ref, o_ref, *, relu):
    x = x_ref[...]
    m = jnp.mean(jnp.mean(x, axis=2, keepdims=True), axis=1, keepdims=True)
    c = x - m
    v = jnp.mean(jnp.mean(c * c, axis=2, keepdims=True), axis=1, keepdims=True)
    y = c * jax.lax.rsqrt(v + 1e-5) * g_ref[...] + b_ref[...] + r_ref[...]
    if relu:
        y = jnp.maximum(y, 0.0)
    o_ref[...] = y


@functools.lru_cache(maxsize=None)
def _make_gn_call(rows, gb, cg, hw, relu, has_res):
    xspec = pl.BlockSpec((gb, cg, hw), lambda i: (i, 0, 0))
    gspec = pl.BlockSpec((gb, cg, 1), lambda i: (i, 0, 0))
    in_specs = [xspec] + ([xspec] if has_res else []) + [gspec, gspec]
    kern = functools.partial(_gn_res_kernel if has_res else _gn_kernel, relu=relu)
    return jax.jit(pl.pallas_call(
        kern,
        out_shape=jax.ShapeDtypeStruct((rows, cg, hw), jnp.float32),
        grid=(rows // gb,),
        in_specs=in_specs,
        out_specs=xspec,
        compiler_params=pltpu.CompilerParams(dimension_semantics=("parallel",)),
    ))


def pallas_groupnorm(x, nparams, groups=16, relu=False, residual=None):
    """GroupNorm(x)*g + b (+ residual) (+ relu) for NCHW x."""
    n, c, h, w = x.shape
    cg = c // groups
    hw = h * w
    rows = n * groups
    gb = groups
    for cand in (8, 4, 2):
        if groups % cand == 0 and rows // cand >= 2:
            gb = cand
            break
    xg = x.reshape(rows, cg, hw)
    g3 = jnp.tile(nparams["g"].reshape(groups, cg, 1), (n, 1, 1))
    b3 = jnp.tile(nparams["b"].reshape(groups, cg, 1), (n, 1, 1))
    args = [xg]
    if residual is not None:
        args.append(residual.reshape(rows, cg, hw))
    args += [g3, b3]
    out = _make_gn_call(rows, gb, cg, hw, relu, residual is not None)(*args)
    return out.reshape(n, c, h, w)


# ----------------------------------------------------------------------- image normalize
def _imnorm_kernel(x_ref, m_ref, s_ref, o_ref):
    o_ref[...] = (x_ref[...] - m_ref[...]) * s_ref[...]


@functools.lru_cache(maxsize=None)
def _make_imnorm_call(rows, hw, tcol):
    return jax.jit(pl.pallas_call(
        _imnorm_kernel,
        out_shape=jax.ShapeDtypeStruct((rows, hw), jnp.float32),
        grid=(hw // tcol,),
        in_specs=[
            pl.BlockSpec((rows, tcol), lambda j: (0, j)),
            pl.BlockSpec((rows, 1), lambda j: (0, 0)),
            pl.BlockSpec((rows, 1), lambda j: (0, 0)),
        ],
        out_specs=pl.BlockSpec((rows, tcol), lambda j: (0, j)),
        compiler_params=pltpu.CompilerParams(dimension_semantics=("parallel",)),
    ))


def pallas_image_normalize(img, mean, std):
    n, c, h, w = img.shape
    hw = h * w
    x2 = img.astype(jnp.float32).reshape(n * c, hw)
    m = jnp.tile(mean, n).reshape(n * c, 1)
    s = jnp.tile(1.0 / std, n).reshape(n * c, 1)
    tcol = hw
    for cand in (2048, 1024, 512, 256, 128):
        if hw % cand == 0 and hw // cand >= 2:
            tcol = cand
            break
    return _make_imnorm_call(n * c, hw, tcol)(x2, m, s).reshape(n, c, h, w)


# -------------------------------------------------- conv: in-kernel tap accumulation
@functools.lru_cache(maxsize=None)
def _make_conv_call(n, n_ph, lrow, cinp, ntap, coutp, th, wrow, rt, taps, relu):
    blk = th * wrow

    def kernel(x_ref, w_ref, b_ref, o_ref):
        r = pl.program_id(1)
        base = r * blk
        acc = jnp.zeros((blk, coutp), jnp.float32)
        for t in range(ntap):
            ph, off = taps[t]
            xt = x_ref[ph, pl.ds(base + off, blk), :]
            acc = acc + jnp.dot(xt, w_ref[t], preferred_element_type=jnp.float32)
        acc = acc + b_ref[...]
        if relu:
            acc = jnp.maximum(acc, 0.0)
        o_ref[0] = acc

    return jax.jit(pl.pallas_call(
        kernel,
        out_shape=jax.ShapeDtypeStruct((n * rt, blk, coutp), jnp.float32),
        grid=(n, rt),
        in_specs=[
            pl.BlockSpec((n_ph, lrow, cinp), lambda i, j: (i, 0, 0)),
            pl.BlockSpec((ntap, cinp, coutp), lambda i, j: (0, 0, 0)),
            pl.BlockSpec((1, coutp), lambda i, j: (0, 0)),
        ],
        out_specs=pl.BlockSpec((1, blk, coutp), lambda i, j: (i * rt + j, 0, 0)),
        compiler_params=pltpu.CompilerParams(
            dimension_semantics=("parallel", "parallel")),
    ))


def conv2d(x, p, stride=1, padding=1, relu=False):
    """NCHW conv2d with bias (+relu).  Taps are accumulated in VMEM (no im2col copy)."""
    wt, b = p["wt"], p["b"]
    k, cout = p["k"], p["cout"]
    ntap, cinp, coutp = wt.shape
    n, c, h, w = x.shape
    ho = (h + 2 * padding - k) // stride + 1
    wo = (w + 2 * padding - k) // stride + 1
    xh = jnp.transpose(x, (0, 2, 3, 1)).astype(jnp.bfloat16)        # NHWC, bf16
    cpad = cinp - c
    if stride == 1:
        hp, wp = h + 2 * padding, w + 2 * padding
        xp = jnp.pad(xh, ((0, 0), (padding, padding + 1), (padding, padding), (0, cpad)))
        n_ph, wrow = 1, wp
        xflat = xp.reshape(n, (hp + 1) * wp, cinp)
        taps = tuple((0, dy * wp + dx) for dy in range(k) for dx in range(k))
    elif stride == 2:
        hp, wp = h + 2 * padding, w + 2 * padding
        hpe, wpe = hp + (hp % 2), wp + (wp % 2)
        xp = jnp.pad(xh, ((0, 0), (padding, hpe - h - padding),
                          (padding, wpe - w - padding), (0, cpad)))
        hh, wh = hpe // 2, wpe // 2
        phases = jnp.stack([xp[:, py::2, px::2, :] for py in range(2) for px in range(2)],
                           axis=1)
        phases = jnp.pad(phases, ((0, 0), (0, 0), (0, 1), (0, 0), (0, 0)))
        n_ph, wrow = 4, wh
        xflat = phases.reshape(n * 4, (hh + 1) * wh, cinp)
        taps = tuple(((dy % 2) * 2 + (dx % 2), (dy // 2) * wh + dx // 2)
                     for dy in range(k) for dx in range(k))
    else:
        raise ValueError("conv2d: only stride 1 or 2 supported")
    rt = 4 if (ho % 4 == 0 and ho >= 16) else (2 if ho % 2 == 0 else 1)
    th = ho // rt
    call = _make_conv_call(n, n_ph, xflat.shape[1], cinp, ntap, coutp, th, wrow, rt,
                           taps, relu)
    out = call(xflat, wt, b)
    out = out.reshape(n, ho, wrow, coutp)[:, :, :wo, :cout]
    return jnp.transpose(out, (0, 3, 1, 2))


def deconv2d(x, p, relu=False):
    # TODO(synk): sub-pixel phase decomposition skipped; ConvTranspose2d(stride=2, pad=1)
    # is evaluated as zero-insertion + dense conv (synthetic weights, no kernel flip).
    k = p["k"]
    n, c, h, w = x.shape
    xd = jnp.zeros((n, c, 2 * h - 1, 2 * w - 1), x.dtype).at[:, :, ::2, ::2].set(x)
    return conv2d(xd, p, stride=1, padding=k - 2, relu=relu)


# -------------------------------------------------------------------------- parameters
def _prep_dense(w, b):
    kin, nout = w.shape
    kp, npd = _round_up(kin, 128), _round_up(nout, 128)
    wp = jnp.zeros((kp, npd), jnp.bfloat16).at[:kin, :nout].set(w.astype(jnp.bfloat16))
    bp = jnp.zeros((1, npd), jnp.float32).at[0, :nout].set(b)
    return {"w": wp, "b": bp, "n": nout}


def _prep_conv(w, b):
    cout, cin, kh, kw = w.shape
    cinp = _round_up(cin, 8)
    coutp = _round_up(cout, 128)
    wt = jnp.transpose(w, (2, 3, 1, 0)).reshape(kh * kw, cin, cout)
    wtp = jnp.zeros((kh * kw, cinp, coutp), jnp.bfloat16).at[:, :cin, :cout].set(
        wt.astype(jnp.bfloat16))
    bp = jnp.zeros((1, coutp), jnp.float32).at[0, :cout].set(b)
    return {"wt": wtp, "b": bp, "k": kh, "cout": cout}


class PGen:
    def __init__(self, seed=0):
        self.key = jax.random.PRNGKey(seed)

    def _take(self):
        self.key, sub = jax.random.split(self.key)
        return sub

    def normal(self, shape, scale):
        return scale * jax.random.normal(self._take(), shape, dtype=jnp.float32)

    def dense_raw(self, cin, cout):
        return (self.normal((cin, cout), 1.0 / math.sqrt(cin)),
                jnp.zeros((cout,), jnp.float32))

    def dense(self, cin, cout):
        return _prep_dense(*self.dense_raw(cin, cout))

    def conv(self, cin, cout, k):
        w = self.normal((cout, cin, k, k), 1.0 / math.sqrt(cin * k * k))
        return _prep_conv(w, jnp.zeros((cout,), jnp.float32))

    def norm(self, c):
        return {"g": jnp.ones((c,), jnp.float32), "b": jnp.zeros((c,), jnp.float32)}


def make_pos_encoding(d_model=256, max_len=1000):
    pos = np.arange(max_len)[:, None].astype(np.float32)
    div = np.exp(np.arange(0, d_model, 2).astype(np.float32) * (-math.log(10000.0) / d_model))
    pe = np.zeros((max_len, 1, d_model), np.float32)
    pe[:, 0, 0::2] = np.sin(pos * div)
    pe[:, 0, 1::2] = np.cos(pos * div)
    return jnp.asarray(pe)


def make_attn_params(g, d=256):
    wq, bq = g.dense_raw(d, d)
    wk, bk = g.dense_raw(d, d)
    wv, bv = g.dense_raw(d, d)
    wo, bo = g.dense_raw(d, d)
    return {"wq": _prep_dense(wq, bq), "wk": _prep_dense(wk, bk),
            "wv": _prep_dense(wv, bv), "wo": _prep_dense(wo, bo),
            "wqk": _prep_dense(jnp.concatenate([wq, wk], axis=1),
                               jnp.concatenate([bq, bk], axis=0))}


def make_transformer_params(g, d, dff, n_enc, n_dec):
    enc = [{"sa": make_attn_params(g, d),
            "lin1": g.dense(d, dff), "lin2": g.dense(dff, d),
            "ln1": g.norm(d), "ln2": g.norm(d)} for _ in range(n_enc)]
    dec = [{"sa": make_attn_params(g, d), "ca": make_attn_params(g, d),
            "lin1": g.dense(d, dff), "lin2": g.dense(dff, d),
            "ln1": g.norm(d), "ln2": g.norm(d), "ln3": g.norm(d)} for _ in range(n_dec)]
    return {"enc": enc, "dec": dec}


def make_backbone_params(g):
    # TODO(synk): torchvision resnet_fpn_backbone (ResNet-50 + FPN) is external; a reduced
    # conv/FPN producing 256-ch maps at strides 4/8/16/32 is used.
    return {
        "stem1": g.conv(3, 32, 3), "stem2": g.conv(32, 64, 3),
        "c3": g.conv(64, 128, 3), "c4": g.conv(128, 256, 3), "c5": g.conv(256, 256, 3),
        "lat2": g.conv(64, 256, 1), "lat3": g.conv(128, 256, 1),
        "lat4": g.conv(256, 256, 1), "lat5": g.conv(256, 256, 1),
        "out0": g.conv(256, 256, 3), "out1": g.conv(256, 256, 3),
        "out2": g.conv(256, 256, 3), "out3": g.conv(256, 256, 3),
    }


def make_bblock(g, cin, cout, stride):
    d = {"conv1": g.conv(cin, cout, 3), "gn1": g.norm(cout),
         "conv2": g.conv(cout, cout, 3), "gn2": g.norm(cout)}
    if stride != 1 or cin != cout:
        d["proj"] = g.conv(cin, cout, 1)
        d["gnp"] = g.norm(cout)
    return d


def make_enc_layer(g, cin, cout, stride, num_blocks=2):
    blocks = [make_bblock(g, cin, cout, stride)]
    for _ in range(num_blocks - 1):
        blocks.append(make_bblock(g, cout, cout, 1))
    return blocks


def make_node(g, cin, cout):
    return {"conv": g.conv(cin, cout, 3), "gn": g.norm(cout)}


def make_ida(g, cin, cout, k):
    return {"proj": g.conv(cin, cout, 3), "gnp": g.norm(cout),
            "up": g.conv(cout, cout, k), "gnu": g.norm(cout)}


def make_params(num_classes=11, dla_l1_n_channels=32, n_enc=2, n_dec=2):
    g = PGen(0)
    nch = [dla_l1_n_channels * (2 ** i) for i in range(4)]          # [32, 64, 128, 256]
    return {
        "mean": jnp.array([0.485, 0.456, 0.406], jnp.float32),
        "std": jnp.array([0.229, 0.224, 0.225], jnp.float32),
        "pe": make_pos_encoding(256, 1000),
        "query_embed": g.normal((100, 256), 0.02),
        "backbone": make_backbone_params(g),
        "tbev8": make_transformer_params(g, 256, 512, n_enc, n_dec),
        "tbev16": make_transformer_params(g, 256, 512, n_enc, n_dec),
        "tbev32": make_transformer_params(g, 256, 128, n_enc, n_dec),
        "tbev64": make_transformer_params(g, 256, 128, n_enc, n_dec),
        "topdown": {
            "down_s1": make_enc_layer(g, 256, nch[0], 1),
            "down_s2": make_enc_layer(g, nch[0], nch[1], 2),
            "down_s4": make_enc_layer(g, nch[1], nch[2], 2),
            "down_s8": make_enc_layer(g, nch[2], nch[3], 2),
            "node_1_s1": make_node(g, nch[1], nch[0]),
            "node_2_s2": make_node(g, nch[2], nch[1]),
            "node_2_s1": make_node(g, nch[1], nch[0]),
            "node_3_s4": make_node(g, nch[3], nch[2]),
            "node_3_s2": make_node(g, nch[2], nch[1]),
            "node_3_s1": make_node(g, nch[1], nch[0]),
            "up_node_1_s1": make_ida(g, nch[1], nch[0], 4),
            "up_node_2_s1": make_ida(g, nch[1], nch[0], 4),
            "up_node_2_s2": make_ida(g, nch[2], nch[1], 4),
            "up_node_3_s1": make_ida(g, nch[1], nch[0], 4),
            "up_node_3_s2": make_ida(g, nch[2], nch[1], 4),
            "up_node_3_s4": make_ida(g, nch[3], nch[2], 3),
            "head_s8": g.conv(nch[3], num_classes, 3),
            "head_s4": g.conv(nch[2], num_classes, 3),
            "head_s2": g.conv(nch[1], num_classes, 3),
            "head_s1": g.conv(nch[0], num_classes, 3),
        },
    }


# ------------------------------------------------------------------------ sub-networks
def upsample2(x):
    return jnp.repeat(jnp.repeat(x, 2, axis=2), 2, axis=3)


def backbone(p, img):
    x = conv2d(img, p["stem1"], stride=2, padding=1, relu=True)
    c2 = conv2d(x, p["stem2"], stride=2, padding=1, relu=True)      # stride 4
    c3 = conv2d(c2, p["c3"], stride=2, padding=1, relu=True)        # stride 8
    c4 = conv2d(c3, p["c4"], stride=2, padding=1, relu=True)        # stride 16
    c5 = conv2d(c4, p["c5"], stride=2, padding=1, relu=True)        # stride 32
    p5 = conv2d(c5, p["lat5"], stride=1, padding=0)
    p4 = conv2d(c4, p["lat4"], stride=1, padding=0) + upsample2(p5)
    p3 = conv2d(c3, p["lat3"], stride=1, padding=0) + upsample2(p4)
    p2 = conv2d(c2, p["lat2"], stride=1, padding=0) + upsample2(p3)
    return [conv2d(p2, p["out0"], padding=1), conv2d(p3, p["out1"], padding=1),
            conv2d(p4, p["out2"], padding=1), conv2d(p5, p["out3"], padding=1)]


def mha(p, q_in, k_in, v_in, nhead=4):
    sq, b, c = q_in.shape
    sk = k_in.shape[0]
    dh = c // nhead
    if q_in is k_in:                                    # fused Q/K projection
        qk = pallas_linear(q_in.reshape(sq * b, c), p["wqk"])
        q2, k2 = qk[:, :c], qk[:, c:]
    else:
        q2 = pallas_linear(q_in.reshape(sq * b, c), p["wq"])
        k2 = pallas_linear(k_in.reshape(sk * b, c), p["wk"])
    v2 = pallas_linear(v_in.reshape(sk * b, c), p["wv"])
    qh = q2.reshape(sq, b, nhead, dh).transpose(1, 2, 0, 3).reshape(b * nhead, sq, dh)
    kh = k2.reshape(sk, b, nhead, dh).transpose(1, 2, 0, 3).reshape(b * nhead, sk, dh)
    vh = v2.reshape(sk, b, nhead, dh).transpose(1, 2, 0, 3).reshape(b * nhead, sk, dh)
    oh = pallas_attention(qh, kh, vh)
    o = oh.reshape(b, nhead, sq, dh).transpose(2, 0, 1, 3).reshape(sq * b, c)
    return pallas_linear(o, p["wo"]).reshape(sq, b, c)


def encoder_layer(p, src, pos):
    s, b, c = src.shape
    q = src + pos
    a = mha(p["sa"], q, q, src)
    x = pallas_res_layernorm(a.reshape(s * b, c), src.reshape(s * b, c), p["ln1"])
    h = pallas_linear(x, p["lin1"], relu=True)
    h = pallas_linear(h, p["lin2"])
    x = pallas_res_layernorm(h, x, p["ln2"])
    return x.reshape(s, b, c)


def decoder_layer(p, tgt, memory, mem_pos, qpos):
    s, b, c = tgt.shape
    q = tgt + qpos
    a = mha(p["sa"], q, q, tgt)
    x = pallas_res_layernorm(a.reshape(s * b, c), tgt.reshape(s * b, c), p["ln1"])
    x3 = x.reshape(s, b, c)
    a = mha(p["ca"], x3 + qpos, mem_pos, memory)
    x = pallas_res_layernorm(a.reshape(s * b, c), x, p["ln2"])
    h = pallas_linear(x, p["lin1"], relu=True)
    h = pallas_linear(h, p["lin2"])
    x = pallas_res_layernorm(h, x, p["ln3"])
    return x.reshape(s, b, c)


def transformer(p, src, tgt, qpos, pos):
    memory = src
    for lp in p["enc"]:
        memory = encoder_layer(lp, memory, pos)
    mem_pos = memory + pos
    out = tgt
    for lp in p["dec"]:
        out = decoder_layer(lp, out, memory, mem_pos, qpos)
    return out                                                       # [Z, N*W, C]


def basic_block(p, x, stride=1):
    out = conv2d(x, p["conv1"], stride=stride, padding=1)
    out = pallas_groupnorm(out, p["gn1"], relu=True)
    out = conv2d(out, p["conv2"], stride=1, padding=1)
    if "proj" in p:
        sc = pallas_groupnorm(conv2d(x, p["proj"], stride=stride, padding=0), p["gnp"])
    else:
        sc = x
    return pallas_groupnorm(out, p["gn2"], relu=True, residual=sc)


def enc_layer(blocks, x, stride):
    x = basic_block(blocks[0], x, stride=stride)
    for bp in blocks[1:]:
        x = basic_block(bp, x, stride=1)
    return x


def dla_node(p, x):
    return pallas_groupnorm(conv2d(x, p["conv"], padding=1), p["gn"], relu=True)


def ida_up(p, x):
    x = pallas_groupnorm(conv2d(x, p["proj"], padding=1), p["gnp"], relu=True)
    x = pallas_groupnorm(deconv2d(x, p["up"]), p["gnu"], relu=True)
    return x


def sample_polar2cart(bev, calib, grid_xz, z_max, z_min, image_width):
    # TODO(synk): exact sample_polar2cart definition not in the provided source; a bilinear
    # polar->cartesian resample with pinhole column projection is used (gather stays in JAX).
    n, c, z, w = bev.shape
    x = grid_xz[..., 0]
    zc_in = grid_xz[..., 1]
    fx = calib[:, 0, 0][:, None, None]
    cx = calib[:, 0, 2][:, None, None]
    u = fx * x / jnp.maximum(zc_in, 1e-3) + cx
    uc = jnp.clip(u / max(image_width - 1, 1) * (w - 1), 0.0, float(w - 1))
    zc = jnp.clip((zc_in - z_min) / max(z_max - z_min, 1e-6) * max(z - 1, 1),
                  0.0, float(max(z - 1, 0)))

    def one(b, zc_b, uc_b):
        z0 = jnp.floor(zc_b).astype(jnp.int32)
        z1 = jnp.clip(z0 + 1, 0, z - 1)
        u0 = jnp.floor(uc_b).astype(jnp.int32)
        u1 = jnp.clip(u0 + 1, 0, w - 1)
        wz = zc_b - z0
        wu = uc_b - u0
        g = lambda zi, ui: b[:, zi, ui]
        return (g(z0, u0) * (1 - wz) * (1 - wu) + g(z0, u1) * (1 - wz) * wu
                + g(z1, u0) * wz * (1 - wu) + g(z1, u1) * wz * wu)

    return jax.vmap(one)(bev, zc, uc)


# ---------------------------------------------------------------------------- reshapes
def trans_reshape(x):
    n, c, h, w = x.shape
    return jnp.transpose(x, (2, 1, 0, 3)).reshape(h, c, n * w).transpose(0, 2, 1)


def bev_reshape(x, n):
    z, nw, c = x.shape
    return x.reshape(z, n, nw // n, c).transpose(1, 3, 0, 2)


# ----------------------------------------------------------------------------- forward
def forward(params, image, calib, grid, cfg):
    n = image.shape[0]
    img = pallas_image_normalize(image, params["mean"], params["std"])
    feats = backbone(params["backbone"], img)
    h_start, h_end = cfg["h_start"], cfg["h_end"]
    feats = [f[:, :, h_start[i]:h_end[i], :] for i, f in enumerate(feats)]

    z_idx = cfg["z_idx"]
    zs = [z_idx[3] - z_idx[2], z_idx[2] - z_idx[1], z_idx[1] - z_idx[0], z_idx[0]]
    pe = params["pe"]
    embed0 = params["query_embed"][0]
    names = ["tbev8", "tbev16", "tbev32", "tbev64"]

    bevs = []
    for i, feat in enumerate(feats):
        _, c, hh, ww = feat.shape
        src = trans_reshape(feat)                            # [H, N*W, 256]
        pos = src + pe[:hh]
        z = zs[i]
        tgt = jnp.broadcast_to(pe[:z], (z, n * ww, c))       # pos_enc(zeros)
        qpos = jnp.broadcast_to(embed0, (z, n * ww, c))      # query_embed(0)
        bev = transformer(params[names[i]], src, tgt, qpos, pos)
        bevs.append(bev_reshape(bev, n))                     # [N, 256, Z, W]

    zr = cfg["z_range"]
    iw = cfg["image_width"]
    bev8 = sample_polar2cart(bevs[0], calib, grid[:, z_idx[2]:], zr[4], zr[3], iw)
    bev16 = sample_polar2cart(bevs[1], calib, grid[:, z_idx[1]:z_idx[2]], zr[3], zr[2], iw)
    bev32 = sample_polar2cart(bevs[2], calib, grid[:, z_idx[0]:z_idx[1]], zr[2], zr[1], iw)
    bev64 = sample_polar2cart(bevs[3], calib, grid[:, :z_idx[0]], zr[1], zr[0], iw)
    bev = jnp.concatenate([bev64, bev32, bev16, bev8], axis=2)   # [N, 256, D, Wo]

    tp = params["topdown"]
    down_s1 = enc_layer(tp["down_s1"], bev, stride=1)
    down_s2 = enc_layer(tp["down_s2"], down_s1, stride=2)
    down_s4 = enc_layer(tp["down_s4"], down_s2, stride=2)
    down_s8 = enc_layer(tp["down_s8"], down_s4, stride=2)

    node_1_s1 = dla_node(tp["node_1_s1"],
                         jnp.concatenate([down_s1, ida_up(tp["up_node_1_s1"], down_s2)], axis=1))
    node_2_s2 = dla_node(tp["node_2_s2"],
                         jnp.concatenate([down_s2, ida_up(tp["up_node_2_s2"], down_s4)], axis=1))
    node_2_s1 = dla_node(tp["node_2_s1"],
                         jnp.concatenate([node_1_s1, ida_up(tp["up_node_2_s1"], node_2_s2)], axis=1))
    node_3_s4 = dla_node(tp["node_3_s4"],
                         jnp.concatenate([down_s4, ida_up(tp["up_node_3_s4"], down_s8)], axis=1))
    node_3_s2 = dla_node(tp["node_3_s2"],
                         jnp.concatenate([node_2_s2, ida_up(tp["up_node_3_s2"], node_3_s4)], axis=1))
    node_3_s1 = dla_node(tp["node_3_s1"],
                         jnp.concatenate([node_2_s1, ida_up(tp["up_node_3_s1"], node_3_s2)], axis=1))

    output_s8 = conv2d(down_s8, tp["head_s8"], padding=1)
    output_s4 = conv2d(node_3_s4, tp["head_s4"], padding=1)
    output_s2 = conv2d(node_3_s2, tp["head_s2"], padding=1)
    output_s1 = conv2d(node_3_s1, tp["head_s1"], padding=1)
    return output_s1, output_s2, output_s4, output_s8


# -------------------------------------------------------------------------------- main
if __name__ == "__main__":
    N = 1
    IMG_H = IMG_W = 64
    NUM_CLASSES = 11
    GRID_RES = 1.0
    # small z_range consistent with the module's z_idx = cumsum(diff(z_range)) / grid_res
    Z_RANGE = [1.0, 2.0, 4.0, 7.0, 13.0]
    z_idx = np.cumsum(np.diff(np.array(Z_RANGE))).astype(np.int32)      # [1, 3, 6, 12]
    D_TOT, W_OUT = int(z_idx[-1]), 12

    # crop buffers (mirror the module's h_start / h_end computation)
    h_cropped = np.array([60.0, 60.0, 60.0, 60.0])
    feat_h = np.array([IMG_H // s for s in (4, 8, 16, 32)], dtype=np.float32)
    crop = feat_h > h_cropped
    h_start = (((feat_h - h_cropped) / 2).astype(np.int32).astype(np.float32) * crop).astype(np.int32)
    h_end = ((h_start + h_cropped) * crop + feat_h * (~crop)).astype(np.int32)

    key = jax.random.PRNGKey(0)
    k_img, _ = jax.random.split(key)
    image = jax.random.uniform(k_img, (N, 3, IMG_H, IMG_W), jnp.float32)
    calib = jnp.broadcast_to(jnp.array([[32.0, 0.0, 32.0],
                                        [0.0, 32.0, 32.0],
                                        [0.0, 0.0, 1.0]], jnp.float32), (N, 3, 3))
    xs = (jnp.arange(W_OUT, dtype=jnp.float32) - W_OUT / 2 + 0.5) * GRID_RES
    zs = Z_RANGE[0] + (jnp.arange(D_TOT, dtype=jnp.float32) + 0.5) * GRID_RES
    gz, gx = jnp.meshgrid(zs, xs, indexing="ij")
    grid = jnp.broadcast_to(jnp.stack([gx, gz], axis=-1), (N, D_TOT, W_OUT, 2))

    params = make_params(num_classes=NUM_CLASSES)
    cfg = {"z_idx": [int(v) for v in z_idx],
           "z_range": Z_RANGE,
           "h_start": [int(v) for v in h_start],
           "h_end": [int(v) for v in h_end],
           "image_width": IMG_W}

    outs = forward(params, image, calib, grid, cfg)
    outs = jax.block_until_ready(outs)

    assert outs[0].shape == (N, NUM_CLASSES, 12, 12)
    assert outs[1].shape == (N, NUM_CLASSES, 6, 6)
    assert outs[2].shape == (N, NUM_CLASSES, 3, 3)
    assert outs[3].shape == (N, NUM_CLASSES, 2, 2)
    assert all(bool(jnp.isfinite(o).all()) for o in outs)
    print("KERNEL_OK")
</pallas_src>

<mosaic_0001>
module attributes {stable_mosaic.version = 11 : i64} {
  func.func @_imnorm_kernel(%arg0: i32, %arg1: memref<3x2048xf32, #tpu.memory_space<vmem>>, %arg2: memref<3x1xf32, #tpu.memory_space<vmem>>, %arg3: memref<3x1xf32, #tpu.memory_space<vmem>>, %arg4: memref<3x2048xf32, #tpu.memory_space<vmem>>) attributes {dimension_semantics = [#tpu.dimension_semantics<parallel>], iteration_bounds = array<i64: 2>, scalar_prefetch = 0 : i64, scratch_operands = 0 : i64, tpu.core_type = #tpu.core_type<tc>, window_params = [{transform_indices = @transform_0, window_bounds = array<i64: 3, 2048>}, {pipeline_mode = #tpu.pipeline_mode<synchronous>, transform_indices = @transform_1, window_bounds = array<i64: 3, 1>}, {pipeline_mode = #tpu.pipeline_mode<synchronous>, transform_indices = @transform_2, window_bounds = array<i64: 3, 1>}, {transform_indices = @transform_3, window_bounds = array<i64: 3, 2048>}]} {
    %c0 = arith.constant 0 : index
    %c0_0 = arith.constant 0 : index
    %0 = vector.load %arg1[%c0, %c0_0] : memref<3x2048xf32, #tpu.memory_space<vmem>>, vector<3x2048xf32>
    %c0_1 = arith.constant 0 : index
    %c0_2 = arith.constant 0 : index
    %1 = vector.load %arg2[%c0_1, %c0_2] : memref<3x1xf32, #tpu.memory_space<vmem>>, vector<3x1xf32>
    %2 = vector.broadcast %1 : vector<3x1xf32> to vector<3x2048xf32>
    %3 = arith.subf %0, %2 : vector<3x2048xf32>
    %c0_3 = arith.constant 0 : index
    %c0_4 = arith.constant 0 : index
    %4 = vector.load %arg3[%c0_3, %c0_4] : memref<3x1xf32, #tpu.memory_space<vmem>>, vector<3x1xf32>
    %5 = vector.broadcast %4 : vector<3x1xf32> to vector<3x2048xf32>
    %6 = arith.mulf %3, %5 : vector<3x2048xf32>
    %c0_5 = arith.constant 0 : index
    %c0_6 = arith.constant 0 : index
    %7 = vector.load %arg4[%c0_5, %c0_6] : memref<3x2048xf32, #tpu.memory_space<vmem>>, vector<3x2048xf32>
    tpu.vector_store %arg4[%c0_5, %c0_6], %6 {strides = array<i32>} : memref<3x2048xf32, #tpu.memory_space<vmem>>, vector<3x2048xf32>,
    return
  }
  func.func @transform_0(%arg0: i32) -> (i32, i32) {
    %c0_i32 = arith.constant 0 : i32
    %c0_i32_0 = arith.constant 0 : i32
    return %c0_i32, %arg0 : i32, i32
  }
  func.func @transform_1(%arg0: i32) -> (i32, i32) {
    %c0_i32 = arith.constant 0 : i32
    %c0_i32_0 = arith.constant 0 : i32
    %c0_i32_1 = arith.constant 0 : i32
    return %c0_i32, %c0_i32_0 : i32, i32
  }
  func.func @transform_2(%arg0: i32) -> (i32, i32) {
    %c0_i32 = arith.constant 0 : i32
    %c0_i32_0 = arith.constant 0 : i32
    %c0_i32_1 = arith.constant 0 : i32
    return %c0_i32, %c0_i32_0 : i32, i32
  }
  func.func @transform_3(%arg0: i32) -> (i32, i32) {
    %c0_i32 = arith.constant 0 : i32
    %c0_i32_0 = arith.constant 0 : i32
    return %c0_i32, %arg0 : i32, i32
  }
}

</mosaic_0001>

<llo_original>
// kernel: tpu_custom_call.1
$region0: #{tpu_custom_call.1}
  #allocation0 [shape = 'u32[]', space=smem, size = 0x4, offset = 0x4, fixed_abs, tag = 'smem constant byte address 0x4 - core index']
  #allocation1 [shape = 'u32[72,128]{1,0:T(1,128)}', space=vmem, size = 0x9000, scoped, tag = 'internal scratch']
  %s0 = inlined_call_operand.hbm [shape: f32[3,4096], index: 0, kind: input, shape index: {}]
  %s1 = inlined_call_operand.vmem [shape: f32[3,1], index: 1, kind: input, shape index: {}]
  %s2 = inlined_call_operand.vmem [shape: f32[3,1], index: 2, kind: input, shape index: {}]
  %s3 = inlined_call_operand.hbm [shape: f32[3,4096], index: 3, kind: output, shape index: {}]
  %s4 = sld [smem:[#allocation0]]
  $region49: #{tpu_custom_call.1} parent=0
    _
  %s6 = ssub.s32 1, %s4
  %s7 = scalar_select 0, %s6, %s4
  $region1: #{tpu_custom_call.1} parent=0
    #allocation2 [shape = 'u8[65536]{0}', space=vmem, size = 0x10000, scoped, tag = 'input window, operand 0']
    #allocation3 [shape = 's32[2]{0}', space=sflag, size = 0x8, scoped, tag = 'scoped memory for tpu_custom_call.1']
    #allocation4 [shape = 's32[2]{0}', space=sflag, size = 0x8, scoped, tag = 'scoped memory for tpu_custom_call.1']
    #allocation5 [shape = 'u8[65536]{0}', space=vmem, size = 0x10000, scoped, tag = 'output window, operand 0']
    %8 = vsyncpa [#allocation3], 0
    %s9 = scalar_lea.sflag [#allocation3], 1
    %10 = vsyncpa %s9, 0
    %11 = vsyncpa [#allocation4], 0
    %s12 = scalar_lea.sflag [#allocation4], 1
    %13 = vsyncpa %s12, 0
    loop: start=0, step=1, limit=4
    $region2: #{tpu_custom_call.1} parent=1 // loop_pre_header
      _
    $region3: #{tpu_custom_call.1} parent=1 // loop_header
      %s15 = sphi 0, %s19
      %p16 = scmp.ge.s32.totalorder %s15, 4
      %s25 = sphi 0, %s27
      %s28 = sphi 0, %s25
      %s29 = sphi 0, %s28
      %s45 = sphi 0, %s29
      %s49 = sphi 0, %s49
      %s51 = sphi 0, %s49
      %s52 = sphi 0, %s51
      %s66 = sphi 0, %s52
      %s70 = sphi 0, %s70
      %s72 = sphi 0, %s70
      %s73 = sphi 0, %s72
      %s87 = sphi 0, %s73
      %s93 = sphi 0, %s95
      %s96 = sphi 0, %s93
      %s97 = sphi 0, %s96
      %s113 = sphi 0, %s97
    $region4: #{tpu_custom_call.1} parent=1 // loop_header_branch
      %18 = sbr.rel (%p16) target = $region8
    $region5: #{tpu_custom_call.1} parent=1 // loop_body
      %s20 = ssub.s32 %s15, 1
      %s21 = ssub.s32 %s15, 2
      %s22 = sadd.s32 %s15, 1
      %s23 = ssub.s32 %s15, %s22
      %p24 = scmp.eq.s32.totalorder %s23, 0
      %s26 = sadd.s32 %s25, 1
      %s27 = scalar_select %p24, %s25, %s26
      %p30 = pneg %p24
      %p31 = scmp.eq.s32.totalorder %s15, 1
      %p32 = por %p30, %p31
      %p33 = scmp.ne.s32.totalorder %s25, %s28
      %p34 = scmp.eq.s32.totalorder %s15, 0
      %p35 = por %p33, %p34
      %p36 = scmp.ne.s32.totalorder %s25, %s28
      %p37 = scmp.eq.s32.totalorder %s20, 1
      %p38 = por %p36, %p37
      %p39 = scmp.ne.s32.totalorder %s28, %s29
      %p40 = scmp.eq.s32.totalorder %s20, 0
      %p41 = por %p39, %p40
      %p42 = scmp.ne.s32.totalorder %s28, %s29
      %p43 = scmp.eq.s32.totalorder %s21, 1
      %p44 = por %p42, %p43
      %p46 = scmp.ne.s32.totalorder %s29, %s45
      %p47 = scmp.eq.s32.totalorder %s21, 0
      %p48 = por %p46, %p47
      %s50 = sadd.s32 %s49, 1
      %p53 = scmp.eq.s32.totalorder %s15, 1
      %p54 = scmp.ne.s32.totalorder %s49, %s51
      %p55 = scmp.eq.s32.totalorder %s15, 0
      %p56 = por %p54, %p55
      %p57 = scmp.ne.s32.totalorder %s49, %s51
      %p58 = scmp.eq.s32.totalorder %s20, 1
      %p59 = por %p57, %p58
      %p60 = scmp.ne.s32.totalorder %s51, %s52
      %p61 = scmp.eq.s32.totalorder %s20, 0
      %p62 = por %p60, %p61
      %p63 = scmp.ne.s32.totalorder %s51, %s52
      %p64 = scmp.eq.s32.totalorder %s21, 1
      %p65 = por %p63, %p64
      %p67 = scmp.ne.s32.totalorder %s52, %s66
      %p68 = scmp.eq.s32.totalorder %s21, 0
      %p69 = por %p67, %p68
      %s71 = sadd.s32 %s70, 1
      %p74 = scmp.eq.s32.totalorder %s15, 1
      %p75 = scmp.ne.s32.totalorder %s70, %s72
      %p76 = scmp.eq.s32.totalorder %s15, 0
      %p77 = por %p75, %p76
      %p78 = scmp.ne.s32.totalorder %s70, %s72
      %p79 = scmp.eq.s32.totalorder %s20, 1
      %p80 = por %p78, %p79
      %p81 = scmp.ne.s32.totalorder %s72, %s73
      %p82 = scmp.eq.s32.totalorder %s20, 0
      %p83 = por %p81, %p82
      %p84 = scmp.ne.s32.totalorder %s72, %s73
      %p85 = scmp.eq.s32.totalorder %s21, 1
      %p86 = por %p84, %p85
      %p88 = scmp.ne.s32.totalorder %s73, %s87
      %p89 = scmp.eq.s32.totalorder %s21, 0
      %p90 = por %p88, %p89
      %s91 = ssub.s32 %s15, %s22
      %p92 = scmp.eq.s32.totalorder %s91, 0
      %s94 = sadd.s32 %s93, 1
      %s95 = scalar_select %p92, %s93, %s94
      %p98 = pneg %p92
      %p99 = scmp.eq.s32.totalorder %s15, 1
      %p100 = por %p98, %p99
      %p101 = scmp.ne.s32.totalorder %s93, %s96
      %p102 = scmp.eq.s32.totalorder %s15, 0
      %p103 = por %p101, %p102
      %p104 = scmp.ne.s32.totalorder %s93, %s96
      %p105 = scmp.eq.s32.totalorder %s20, 1
      %p106 = por %p104, %p105
      %p107 = scmp.ne.s32.totalorder %s96, %s97
      %p108 = scmp.eq.s32.totalorder %s20, 0
      %p109 = por %p107, %p108
      %p110 = scmp.ne.s32.totalorder %s96, %s97
      %p111 = scmp.eq.s32.totalorder %s21, 1
      %p112 = por %p110, %p111
      %p114 = scmp.ne.s32.totalorder %s97, %s113
      %p115 = scmp.eq.s32.totalorder %s21, 0
      %p116 = por %p114, %p115
      %p117 = scmp.le.s32.totalorder 1, %s15
      %p118 = scmp.lt.s32.totalorder %s15, 3
      %p119 = pnand %p117, %p118
      %p120 = pneg %p119
      // Predicated region
      $region9: #{tpu_custom_call.1} parent=5 // pred_check
        _
      $region10: #{tpu_custom_call.1} parent=5 // pred_check_branch
        %122 = sbr.rel (%p119) target = $region12
      $region11: #{tpu_custom_call.1} parent=5 // pred_region
        %s123 = ssub.s32 %s15, 1
        // Predicated region
        $region13: #{tpu_custom_call.1} parent=11 // pred_check
          %p124 = pneg %p62
        $region14: #{tpu_custom_call.1} parent=11 // pred_check_branch
          %126 = sbr.rel (%p124) target = $region16
        $region15: #{tpu_custom_call.1} parent=11 // pred_region
          _
        $region16: #{tpu_custom_call.1} parent=11 // pred_fallthru
          _
        // Predicated region
        $region17: #{tpu_custom_call.1} parent=11 // pred_check
          %p127 = pneg %p83
        $region18: #{tpu_custom_call.1} parent=11 // pred_check_branch
          %129 = sbr.rel (%p127) target = $region20
        $region19: #{tpu_custom_call.1} parent=11 // pred_region
          _
        $region20: #{tpu_custom_call.1} parent=11 // pred_fallthru
          _
      $region12: #{tpu_custom_call.1} parent=5 // pred_fallthru
        _
      %p130 = scmp.lt.s32.totalorder %s15, 2
      // Predicated region
      $region21: #{tpu_custom_call.1} parent=5 // pred_check
        %p131 = pneg %p130
      $region22: #{tpu_custom_call.1} parent=5 // pred_check_branch
        %133 = sbr.rel (%p131) target = $region24
      $region23: #{tpu_custom_call.1} parent=5 // pred_region
        // Predicated region
        $region25: #{tpu_custom_call.1} parent=23 // pred_check
          %p134 = pneg %p35
        $region26: #{tpu_custom_call.1} parent=23 // pred_check_branch
          %136 = sbr.rel (%p134) target = $region28
        $region27: #{tpu_custom_call.1} parent=23 // pred_region
          %s137 = sand.u32 %s25, 1
          %s138 = scalar_lea.sflag [#allocation3], %s137
          %s139 = sand.u32 %s25, 1
          %s140 = smul.addr %s139, 64
          %s141 = scalar_lea.vmem [#allocation2], %s140
          %s142 = smul.u32 16, %s15
          %144 = vsyncadd %s138, 0
          %s145 = smul.addr %s142, 4
          %s146 = scalar_lea.hbm %s0, %s145
          %s148 = sshll.u32 %s146, 4
          %s149 = int_to_ptr.hbm [resolvable:$true] %s148
          %s150 = sshll.u32 %s141, 4
          %s151 = int_to_ptr.vmem [resolvable:$true] %s150
          %153 = dma.hbm_to_vmem [thread:$0]  %s149, 1024, %s151, %s138
        $region28: #{tpu_custom_call.1} parent=23 // pred_fallthru
          _
      $region24: #{tpu_custom_call.1} parent=5 // pred_fallthru
        _
      %p154 = scmp.le.s32.totalorder 1, %s15
      %p155 = scmp.lt.s32.totalorder %s15, 3
      %p156 = pnand %p154, %p155
      %p157 = pneg %p156
      // Predicated region
      $region29: #{tpu_custom_call.1} parent=5 // pred_check
        _
      $region30: #{tpu_custom_call.1} parent=5 // pred_check_branch
        %159 = sbr.rel (%p156) target = $region32
      $region31: #{tpu_custom_call.1} parent=5 // pred_region
        %s160 = ssub.s32 %s15, 1
        %s161 = sand.u32 %s28, 1
        %s162 = scalar_lea.sflag [#allocation3], %s161
        %s163 = sand.u32 %s28, 1
        %s164 = smul.addr %s163, 64
        %s165 = scalar_lea.vmem [#allocation2], %s164
        // Predicated region
        $region33: #{tpu_custom_call.1} parent=31 // pred_check
          %p166 = pneg %p41
        $region34: #{tpu_custom_call.1} parent=31 // pred_check_branch
          %168 = sbr.rel (%p166) target = $region36
        $region35: #{tpu_custom_call.1} parent=31 // pred_region
          %170 = dma.done %s162, 1024
        $region36: #{tpu_custom_call.1} parent=31 // pred_fallthru
          _
        %s171 = sand.u32 %s28, 1
        %s172 = scalar_lea.sflag [#allocation3], %s171
        %s173 = sand.u32 %s28, 1
        %s174 = smul.addr %s173, 64
        %s175 = scalar_lea.vmem [#allocation2], %s174
        %p176 = pneg %p41
        %p177 = pneg %p38
        %p178 = pneg %p62
        %p179 = pneg %p59
        %p180 = pneg %p83
        %p181 = pneg %p80
        %p182 = pneg %p109
        %p183 = pneg %p106
        %s184 = sand.u32 %s96, 1
        %s185 = scalar_lea.sflag [#allocation4], %s184
        %s186 = sand.u32 %s96, 1
        %s187 = smul.addr %s186, 64
        %s188 = scalar_lea.vmem [#allocation5], %s187
        %s189 = smul.u32 16, %s20
        %s190 = smul.u32 16, %s20
        %v191 = vld [vmem:[%s165] sm:$0x77]
        %v192 = vld [vmem:[%s165 + $0x8] sm:$0x77]
        %v193 = vld [vmem:[%s165 + $0x10] sm:$0x77]
        %v194 = vld [vmem:[%s165 + $0x18] sm:$0x77]
        %v195 = vld [vmem:[%s165 + $0x20] sm:$0x77]
        %v196 = vld [vmem:[%s165 + $0x28] sm:$0x77]
        %v197 = vld [vmem:[%s165 + $0x30] sm:$0x77]
        %v198 = vld [vmem:[%s165 + $0x38] sm:$0x77]
        %v199 = vld [vmem:[%s1] sm:$0x7]
        %201 = vset.pattern.permute.xlu0 0
        %202 = vperm.xlu0 %201, %v199
        %v203 = vpop.permute.xlu0 %202
        %v205 = vunpack.c.l.s4 839922192
        %v206 = vunpack.c.0.s8 %v205
        %v207 = vperm.slane %v203, %v206
        %v209 = vsub.f32 %v191, %v207
        %v210 = vsub.f32 %v192, %v207
        %v211 = vsub.f32 %v193, %v207
        %v212 = vsub.f32 %v194, %v207
        %v213 = vsub.f32 %v195, %v207
        %v214 = vsub.f32 %v196, %v207
        %v215 = vsub.f32 %v197, %v207
        %v216 = vsub.f32 %v198, %v207
        %v217 = vld [vmem:[%s2] sm:$0x7]
        %219 = vset.pattern.permute.xlu0 0
        %220 = vperm.xlu0 %219, %v217
        %v221 = vpop.permute.xlu0 %220
        %v223 = vunpack.c.l.s4 839922192
        %v224 = vunpack.c.0.s8 %v223
        %v225 = vperm.slane %v221, %v224
        %v227 = vmul.f32 %v209, %v225
        %v228 = vmul.f32 %v210, %v225
        %v229 = vmul.f32 %v211, %v225
        %v230 = vmul.f32 %v212, %v225
        %v231 = vmul.f32 %v213, %v225
        %v232 = vmul.f32 %v214, %v225
        %v233 = vmul.f32 %v215, %v225
        %v234 = vmul.f32 %v216, %v225
        %235 = vst [vmem:[%s188] sm:$0x77] %v227
        %236 = vst [vmem:[%s188 + $0x8] sm:$0x77] %v228
        %237 = vst [vmem:[%s188 + $0x10] sm:$0x77] %v229
        %238 = vst [vmem:[%s188 + $0x18] sm:$0x77] %v230
        %239 = vst [vmem:[%s188 + $0x20] sm:$0x77] %v231
        %240 = vst [vmem:[%s188 + $0x28] sm:$0x77] %v232
        %241 = vst [vmem:[%s188 + $0x30] sm:$0x77] %v233
        %242 = vst [vmem:[%s188 + $0x38] sm:$0x77] %v234
        %s243 = sand.u32 %s96, 1
        %s244 = scalar_lea.sflag [#allocation4], %s243
        %s245 = sand.u32 %s96, 1
        %s246 = smul.addr %s245, 64
        %s247 = scalar_lea.vmem [#allocation5], %s246
        // Predicated region
        $region37: #{tpu_custom_call.1} parent=31 // pred_check
          %p248 = pneg %p106
        $region38: #{tpu_custom_call.1} parent=31 // pred_check_branch
          %250 = sbr.rel (%p248) target = $region40
        $region39: #{tpu_custom_call.1} parent=31 // pred_region
          %s251 = smul.u32 16, %s20
          %253 = vsyncadd %s244, 0
          %s254 = smul.addr %s251, 4
          %s255 = scalar_lea.hbm %s3, %s254
          %s257 = sshll.u32 %s247, 4
          %s258 = int_to_ptr.vmem [resolvable:$true] %s257
          %s259 = sshll.u32 %s255, 4
          %s260 = int_to_ptr.hbm [resolvable:$true] %s259
          %262 = dma.vmem_to_hbm [thread:$0]  %s258, 1024, %s260, %s244
        $region40: #{tpu_custom_call.1} parent=31 // pred_fallthru
          _
      $region32: #{tpu_custom_call.1} parent=5 // pred_fallthru
        _
      %p263 = scmp.le.s32.totalorder 2, %s15
      // Predicated region
      $region41: #{tpu_custom_call.1} parent=5 // pred_check
        %p264 = pneg %p263
      $region42: #{tpu_custom_call.1} parent=5 // pred_check_branch
        %266 = sbr.rel (%p264) target = $region44
      $region43: #{tpu_custom_call.1} parent=5 // pred_region
        %s267 = ssub.s32 %s15, 2
        // Predicated region
        $region45: #{tpu_custom_call.1} parent=43 // pred_check
          %p268 = pneg %p112
        $region46: #{tpu_custom_call.1} parent=43 // pred_check_branch
          %270 = sbr.rel (%p268) target = $region48
        $region47: #{tpu_custom_call.1} parent=43 // pred_region
          %s271 = sand.u32 %s97, 1
          %s272 = scalar_lea.sflag [#allocation4], %s271
          %s273 = sand.u32 %s97, 1
          %s274 = smul.addr %s273, 64
          %s275 = scalar_lea.vmem [#allocation5], %s274
          %277 = dma.done %s272, 1024
        $region48: #{tpu_custom_call.1} parent=43 // pred_fallthru
          _
      $region44: #{tpu_custom_call.1} parent=5 // pred_fallthru
        _
    $region6: #{tpu_custom_call.1} parent=1 // loop_footer
      %s19 = sadd.s32 1, %s15
    $region7: #{tpu_custom_call.1} parent=1 // loop_footer_branch
      %14 = sbr.rel target = $region3
    $region8: #{tpu_custom_call.1} parent=1 // loop_exit
      _
    %278 = vsyncpa [#allocation3], 1
    %s279 = scalar_lea.sflag [#allocation3], 1
    %280 = vsyncpa %s279, 1
    %281 = vsyncpa [#allocation4], 1
    %s282 = scalar_lea.sflag [#allocation4], 1
    %283 = vsyncpa %s282, 1

</llo_original>
